<compile_context>
chip_gen: v5e
topology: v5e:2x2
jax: 0.10.0
libtpu: 0.0.40
codegen_flags: <defaults>
</compile_context>

<pallas_src>
import jax
import jax.numpy as jnp
from jax.experimental import pallas as pl
from jax.experimental.pallas import tpu as pltpu

BN_EPS = 1e-5


def _policy_kernel(
    x_ref,                          # [B, D_in]  f32
    w1_ref, g1_ref, be1_ref,        # fc1 weight (bias folded away by BN), bn1 gamma/beta
    w2_ref, g2_ref, be2_ref,        # fc2 weight, bn2 gamma/beta
    wmu_ref, bmu_ref,               # mu weight/bias, lane-padded to n_pad
    o_ref,                          # [B, n_pad] f32
):
    def linear(h, w_ref):
        w = w_ref[...]
        # Cast the activation to the weight dtype (no-op for f32 weights,
        # bf16 for MXU-native weights); accumulate in f32.
        return jnp.dot(h.astype(w.dtype), w, preferred_element_type=jnp.float32)

    def bn_relu(h, g_ref, be_ref):
        # Training-mode BatchNorm1d with biased variance, single pass over h.
        mean = jnp.mean(h, axis=0, keepdims=True)
        c = h - mean
        var = jnp.mean(c * c, axis=0, keepdims=True)
        scale = g_ref[...] * jax.lax.rsqrt(var + BN_EPS)
        return jnp.maximum(c * scale + be_ref[...], 0.0)

    x = x_ref[...]
    h = bn_relu(linear(x, w1_ref), g1_ref, be1_ref)
    h = bn_relu(linear(h, w2_ref), g2_ref, be2_ref)
    out = linear(h, wmu_ref) + bmu_ref[...]
    o_ref[...] = jnp.tanh(out).astype(o_ref.dtype)


@jax.jit
def policy_forward(state, params):
    B, d_in = state.shape
    f1 = params["w1"].shape[1]
    f2 = params["w2"].shape[1]
    n_actions = params["wmu"].shape[1]

    # Lane-dense output: pad the action dim up to a multiple of 128 so the
    # output store is an unmasked full-lane store; slice the pad off below.
    n_pad = 128 * pl.cdiv(n_actions, 128)
    wmu_p = jnp.pad(params["wmu"], ((0, 0), (0, n_pad - n_actions)))
    bmu_p = jnp.pad(params["bmu"], ((0, 0), (0, n_pad - n_actions)))

    args = (
        state,
        params["w1"], params["g1"], params["be1"],
        params["w2"], params["g2"], params["be2"],
        wmu_p, bmu_p,
    )
    vmem_spec = pl.BlockSpec(memory_space=pltpu.MemorySpace.VMEM)

    flops = 2 * B * (d_in * f1 + f1 * f2 + f2 * n_pad) + 10 * B * (f1 + f2)
    transcendentals = B * n_pad + f1 + f2                     # tanh + 2x rsqrt
    bytes_accessed = (
        sum(int(a.size) * a.dtype.itemsize for a in args) + B * n_pad * 4
    )

    out = pl.pallas_call(
        _policy_kernel,
        out_shape=jax.ShapeDtypeStruct((B, n_pad), jnp.float32),
        in_specs=[vmem_spec] * len(args),
        out_specs=vmem_spec,
        cost_estimate=pl.CostEstimate(
            flops=flops,
            transcendentals=transcendentals,
            bytes_accessed=bytes_accessed,
        ),
    )(*args)
    return out[:, :n_actions]


def init_policy_params(key, input_dims, fc1_dims, fc2_dims, n_actions,
                       weight_dtype=jnp.float32):
    """Deterministic init mirroring the PyTorch module's __init__.

    Weights stored transposed: [in_features, out_features].
    b1/b2 are kept (to mirror the PyTorch state dict / reference) but are not
    consumed by the kernel — they are mathematically cancelled by BatchNorm.
    weight_dtype=jnp.bfloat16 is recommended on v6e/v7x (MXU-native).
    """
    k1w, k1b, k2w, k2b, k3w, k3b = jax.random.split(key, 6)

    # PyTorch code: bound = 1/sqrt(weight.size()[0]) == 1/sqrt(out_features)
    bnd1 = 1.0 / jnp.sqrt(jnp.float32(fc1_dims))
    bnd2 = 1.0 / jnp.sqrt(jnp.float32(fc2_dims))
    bnd3 = 0.003

    params = dict(
        w1=jax.random.uniform(k1w, (input_dims, fc1_dims), jnp.float32,
                              -bnd1, bnd1).astype(weight_dtype),
        b1=jax.random.uniform(k1b, (1, fc1_dims), jnp.float32, -bnd1, bnd1),
        g1=jnp.ones((1, fc1_dims), jnp.float32),     # bn1 weight
        be1=jnp.zeros((1, fc1_dims), jnp.float32),   # bn1 bias
        w2=jax.random.uniform(k2w, (fc1_dims, fc2_dims), jnp.float32,
                              -bnd2, bnd2).astype(weight_dtype),
        b2=jax.random.uniform(k2b, (1, fc2_dims), jnp.float32, -bnd2, bnd2),
        g2=jnp.ones((1, fc2_dims), jnp.float32),     # bn2 weight
        be2=jnp.zeros((1, fc2_dims), jnp.float32),   # bn2 bias
        wmu=jax.random.uniform(k3w, (fc2_dims, n_actions), jnp.float32,
                               -bnd3, bnd3).astype(weight_dtype),
        bmu=jax.random.uniform(k3b, (1, n_actions), jnp.float32, -bnd3, bnd3),
    )
    return params


def policy_forward_ref(state, params):
    """Pure-JAX f32 reference matching the PyTorch forward (train-mode BN)."""
    def bn(h, g, b):
        mean = jnp.mean(h, axis=0, keepdims=True)
        var = jnp.mean((h - mean) ** 2, axis=0, keepdims=True)
        return (h - mean) / jnp.sqrt(var + BN_EPS) * g + b

    w1 = params["w1"].astype(jnp.float32)
    w2 = params["w2"].astype(jnp.float32)
    wmu = params["wmu"].astype(jnp.float32)
    h = state @ w1 + params["b1"]          # bias included here; cancelled by BN
    h = jnp.maximum(bn(h, params["g1"], params["be1"]), 0.0)
    h = h @ w2 + params["b2"]
    h = jnp.maximum(bn(h, params["g2"], params["be2"]), 0.0)
    return jnp.tanh(h @ wmu + params["bmu"])


if __name__ == "__main__":
    # Small shapes consistent with Policy(lr, input_dims, fc1, fc2, n_actions, name);
    # batch kept large enough to amortize per-call overhead (minibatch-style).
    batch = 256
    input_dims, fc1_dims, fc2_dims, n_actions = 16, 32, 32, 8

    key = jax.random.PRNGKey(0)
    kx, kp = jax.random.split(key)
    state = jax.random.normal(kx, (batch, input_dims), dtype=jnp.float32)

    # f32 weights: tight check against the pure-JAX / PyTorch-equivalent reference.
    params = init_policy_params(kp, input_dims, fc1_dims, fc2_dims, n_actions)
    out = policy_forward(state, params)
    jax.block_until_ready(out)
    ref = policy_forward_ref(state, params)
    assert out.shape == (batch, n_actions)
    assert jnp.allclose(out, ref, atol=1e-4, rtol=1e-4), float(
        jnp.max(jnp.abs(out - ref)))

    # bf16 weights (MXU-native on v6e/v7x), f32 activations/accumulation.
    params_bf16 = init_policy_params(kp, input_dims, fc1_dims, fc2_dims,
                                     n_actions, weight_dtype=jnp.bfloat16)
    out_bf16 = policy_forward(state, params_bf16)
    jax.block_until_ready(out_bf16)
    assert out_bf16.shape == (batch, n_actions)
    assert jnp.allclose(out_bf16, ref, atol=2e-2, rtol=2e-2), float(
        jnp.max(jnp.abs(out_bf16 - ref)))

    print("KERNEL_OK")
</pallas_src>

<mosaic_0001>
module attributes {stable_mosaic.version = 11 : i64} {
  func.func @_policy_kernel(%arg0: memref<256x16xf32, #tpu.memory_space<vmem>>, %arg1: memref<16x32xf32, #tpu.memory_space<vmem>>, %arg2: memref<1x32xf32, #tpu.memory_space<vmem>>, %arg3: memref<1x32xf32, #tpu.memory_space<vmem>>, %arg4: memref<32x32xf32, #tpu.memory_space<vmem>>, %arg5: memref<1x32xf32, #tpu.memory_space<vmem>>, %arg6: memref<1x32xf32, #tpu.memory_space<vmem>>, %arg7: memref<32x128xf32, #tpu.memory_space<vmem>>, %arg8: memref<1x128xf32, #tpu.memory_space<vmem>>, %arg9: memref<256x128xf32, #tpu.memory_space<vmem>>) attributes {dimension_semantics = [], scalar_prefetch = 0 : i64, scratch_operands = 0 : i64, tpu.core_type = #tpu.core_type<tc>} {
    %c0 = arith.constant 0 : index
    %c0_0 = arith.constant 0 : index
    %0 = vector.load %arg0[%c0, %c0_0] : memref<256x16xf32, #tpu.memory_space<vmem>>, vector<256x16xf32>
    %c0_1 = arith.constant 0 : index
    %c0_2 = arith.constant 0 : index
    %1 = vector.load %arg1[%c0_1, %c0_2] : memref<16x32xf32, #tpu.memory_space<vmem>>, vector<16x32xf32>
    %cst = arith.constant dense<0.000000e+00> : vector<256x32xf32>
    %2 = tpu.matmul %0, %1, %cst {dimension_numbers = #tpu.dot_dimension_numbers<[1], [0], [0], [1], [0, 0, 1, 1], [], []>} : vector<256x16xf32>, vector<16x32xf32>, vector<256x32xf32> -> vector<256x32xf32>
    %cst_3 = arith.constant dense<0.000000e+00> : vector<32xf32>
    %3 = vector.multi_reduction <add>, %2, %cst_3 [0] : vector<256x32xf32> to vector<32xf32>
    %4 = vector.shape_cast %3 : vector<32xf32> to vector<1x32xf32>
    %cst_4 = arith.constant 2.560000e+02 : f32
    %5 = vector.broadcast %cst_4 : f32 to vector<1x32xf32>
    %6 = arith.divf %4, %5 : vector<1x32xf32>
    %7 = vector.broadcast %6 : vector<1x32xf32> to vector<256x32xf32>
    %8 = arith.subf %2, %7 : vector<256x32xf32>
    %9 = arith.mulf %8, %8 : vector<256x32xf32>
    %cst_5 = arith.constant dense<0.000000e+00> : vector<32xf32>
    %10 = vector.multi_reduction <add>, %9, %cst_5 [0] : vector<256x32xf32> to vector<32xf32>
    %11 = vector.shape_cast %10 : vector<32xf32> to vector<1x32xf32>
    %cst_6 = arith.constant 2.560000e+02 : f32
    %12 = vector.broadcast %cst_6 : f32 to vector<1x32xf32>
    %13 = arith.divf %11, %12 : vector<1x32xf32>
    %c0_7 = arith.constant 0 : index
    %c0_8 = arith.constant 0 : index
    %14 = vector.load %arg2[%c0_7, %c0_8] : memref<1x32xf32, #tpu.memory_space<vmem>>, vector<1x32xf32>
    %cst_9 = arith.constant 9.99999974E-6 : f32
    %15 = vector.broadcast %cst_9 : f32 to vector<1x32xf32>
    %16 = arith.addf %13, %15 : vector<1x32xf32>
    %17 = math.rsqrt %16 : vector<1x32xf32>
    %18 = arith.mulf %14, %17 : vector<1x32xf32>
    %19 = vector.broadcast %18 : vector<1x32xf32> to vector<256x32xf32>
    %20 = arith.mulf %8, %19 : vector<256x32xf32>
    %c0_10 = arith.constant 0 : index
    %c0_11 = arith.constant 0 : index
    %21 = vector.load %arg3[%c0_10, %c0_11] : memref<1x32xf32, #tpu.memory_space<vmem>>, vector<1x32xf32>
    %22 = vector.broadcast %21 : vector<1x32xf32> to vector<256x32xf32>
    %23 = arith.addf %20, %22 : vector<256x32xf32>
    %cst_12 = arith.constant 0.000000e+00 : f32
    %24 = vector.broadcast %cst_12 : f32 to vector<256x32xf32>
    %25 = arith.maximumf %23, %24 : vector<256x32xf32>
    %c0_13 = arith.constant 0 : index
    %c0_14 = arith.constant 0 : index
    %26 = vector.load %arg4[%c0_13, %c0_14] : memref<32x32xf32, #tpu.memory_space<vmem>>, vector<32x32xf32>
    %cst_15 = arith.constant dense<0.000000e+00> : vector<256x32xf32>
    %27 = tpu.matmul %25, %26, %cst_15 {dimension_numbers = #tpu.dot_dimension_numbers<[1], [0], [0], [1], [0, 0, 1, 1], [], []>} : vector<256x32xf32>, vector<32x32xf32>, vector<256x32xf32> -> vector<256x32xf32>
    %cst_16 = arith.constant dense<0.000000e+00> : vector<32xf32>
    %28 = vector.multi_reduction <add>, %27, %cst_16 [0] : vector<256x32xf32> to vector<32xf32>
    %29 = vector.shape_cast %28 : vector<32xf32> to vector<1x32xf32>
    %cst_17 = arith.constant 2.560000e+02 : f32
    %30 = vector.broadcast %cst_17 : f32 to vector<1x32xf32>
    %31 = arith.divf %29, %30 : vector<1x32xf32>
    %32 = vector.broadcast %31 : vector<1x32xf32> to vector<256x32xf32>
    %33 = arith.subf %27, %32 : vector<256x32xf32>
    %34 = arith.mulf %33, %33 : vector<256x32xf32>
    %cst_18 = arith.constant dense<0.000000e+00> : vector<32xf32>
    %35 = vector.multi_reduction <add>, %34, %cst_18 [0] : vector<256x32xf32> to vector<32xf32>
    %36 = vector.shape_cast %35 : vector<32xf32> to vector<1x32xf32>
    %cst_19 = arith.constant 2.560000e+02 : f32
    %37 = vector.broadcast %cst_19 : f32 to vector<1x32xf32>
    %38 = arith.divf %36, %37 : vector<1x32xf32>
    %c0_20 = arith.constant 0 : index
    %c0_21 = arith.constant 0 : index
    %39 = vector.load %arg5[%c0_20, %c0_21] : memref<1x32xf32, #tpu.memory_space<vmem>>, vector<1x32xf32>
    %cst_22 = arith.constant 9.99999974E-6 : f32
    %40 = vector.broadcast %cst_22 : f32 to vector<1x32xf32>
    %41 = arith.addf %38, %40 : vector<1x32xf32>
    %42 = math.rsqrt %41 : vector<1x32xf32>
    %43 = arith.mulf %39, %42 : vector<1x32xf32>
    %44 = vector.broadcast %43 : vector<1x32xf32> to vector<256x32xf32>
    %45 = arith.mulf %33, %44 : vector<256x32xf32>
    %c0_23 = arith.constant 0 : index
    %c0_24 = arith.constant 0 : index
    %46 = vector.load %arg6[%c0_23, %c0_24] : memref<1x32xf32, #tpu.memory_space<vmem>>, vector<1x32xf32>
    %47 = vector.broadcast %46 : vector<1x32xf32> to vector<256x32xf32>
    %48 = arith.addf %45, %47 : vector<256x32xf32>
    %cst_25 = arith.constant 0.000000e+00 : f32
    %49 = vector.broadcast %cst_25 : f32 to vector<256x32xf32>
    %50 = arith.maximumf %48, %49 : vector<256x32xf32>
    %c0_26 = arith.constant 0 : index
    %c0_27 = arith.constant 0 : index
    %51 = vector.load %arg7[%c0_26, %c0_27] : memref<32x128xf32, #tpu.memory_space<vmem>>, vector<32x128xf32>
    %cst_28 = arith.constant dense<0.000000e+00> : vector<256x128xf32>
    %52 = tpu.matmul %50, %51, %cst_28 {dimension_numbers = #tpu.dot_dimension_numbers<[1], [0], [0], [1], [0, 0, 1, 1], [], []>} : vector<256x32xf32>, vector<32x128xf32>, vector<256x128xf32> -> vector<256x128xf32>
    %c0_29 = arith.constant 0 : index
    %c0_30 = arith.constant 0 : index
    %53 = vector.load %arg8[%c0_29, %c0_30] : memref<1x128xf32, #tpu.memory_space<vmem>>, vector<1x128xf32>
    %54 = vector.broadcast %53 : vector<1x128xf32> to vector<256x128xf32>
    %55 = arith.addf %52, %54 : vector<256x128xf32>
    %56 = math.tanh %55 : vector<256x128xf32>
    %c0_31 = arith.constant 0 : index
    %c0_32 = arith.constant 0 : index
    %57 = vector.load %arg9[%c0_31, %c0_32] : memref<256x128xf32, #tpu.memory_space<vmem>>, vector<256x128xf32>
    tpu.vector_store %arg9[%c0_31, %c0_32], %56 {strides = array<i32>} : memref<256x128xf32, #tpu.memory_space<vmem>>, vector<256x128xf32>,
    return
  }
}

</mosaic_0001>

<llo_original>
// kernel: policy_forward.1
$region0: #{policy_forward.1}
  #allocation0 [shape = 'u32[]', space=smem, size = 0x4, offset = 0x4, fixed_abs, tag = 'smem constant byte address 0x4 - core index']
  #allocation1 [shape = 'u32[72,128]{1,0:T(1,128)}', space=vmem, size = 0x9000, scoped, tag = 'internal scratch']
  %s0 = inlined_call_operand.vmem [shape: f32[256,16], index: 0, kind: input, shape index: {}]
  %s1 = inlined_call_operand.vmem [shape: f32[16,32], index: 1, kind: input, shape index: {}]
  %s2 = inlined_call_operand.vmem [shape: f32[1,32], index: 2, kind: input, shape index: {}]
  %s3 = inlined_call_operand.vmem [shape: f32[1,32], index: 3, kind: input, shape index: {}]
  %s4 = inlined_call_operand.vmem [shape: f32[32,32], index: 4, kind: input, shape index: {}]
  %s5 = inlined_call_operand.vmem [shape: f32[1,32], index: 5, kind: input, shape index: {}]
  %s6 = inlined_call_operand.vmem [shape: f32[1,32], index: 6, kind: input, shape index: {}]
  %s7 = inlined_call_operand.vmem [shape: f32[32,128], index: 7, kind: input, shape index: {}]
  %s8 = inlined_call_operand.vmem [shape: f32[1,128], index: 8, kind: input, shape index: {}]
  %s9 = inlined_call_operand.vmem [shape: f32[256,128], index: 9, kind: output, shape index: {}]
  %s10 = sld [smem:[#allocation0]]
  $region46: #{policy_forward.1} parent=0
    _
  %s12 = ssub.s32 1, %s10
  %s13 = scalar_select 0, %s12, %s10
  // Predicated region
  $region2: #{policy_forward.1} parent=0 // pred_check
    _
  $region3: #{policy_forward.1} parent=0 // pred_check_branch
    %15 = sbr.rel (0) target = $region5
  $region4: #{policy_forward.1} parent=0 // pred_region
    _
  $region5: #{policy_forward.1} parent=0 // pred_fallthru
    _
  // Predicated region
  $region6: #{policy_forward.1} parent=0 // pred_check
    _
  $region7: #{policy_forward.1} parent=0 // pred_check_branch
    %17 = sbr.rel (0) target = $region9
  $region8: #{policy_forward.1} parent=0 // pred_region
    _
  $region9: #{policy_forward.1} parent=0 // pred_fallthru
    _
  // Predicated region
  $region10: #{policy_forward.1} parent=0 // pred_check
    _
  $region11: #{policy_forward.1} parent=0 // pred_check_branch
    %19 = sbr.rel (0) target = $region13
  $region12: #{policy_forward.1} parent=0 // pred_region
    _
  $region13: #{policy_forward.1} parent=0 // pred_fallthru
    _
  // Predicated region
  $region14: #{policy_forward.1} parent=0 // pred_check
    _
  $region15: #{policy_forward.1} parent=0 // pred_check_branch
    %21 = sbr.rel (0) target = $region17
  $region16: #{policy_forward.1} parent=0 // pred_region
    _
  $region17: #{policy_forward.1} parent=0 // pred_fallthru
    _
  // Predicated region
  $region18: #{policy_forward.1} parent=0 // pred_check
    _
  $region19: #{policy_forward.1} parent=0 // pred_check_branch
    %23 = sbr.rel (0) target = $region21
  $region20: #{policy_forward.1} parent=0 // pred_region
    _
  $region21: #{policy_forward.1} parent=0 // pred_fallthru
    _
  // Predicated region
  $region22: #{policy_forward.1} parent=0 // pred_check
    _
  $region23: #{policy_forward.1} parent=0 // pred_check_branch
    %25 = sbr.rel (0) target = $region25
  $region24: #{policy_forward.1} parent=0 // pred_region
    _
  $region25: #{policy_forward.1} parent=0 // pred_fallthru
    _
  // Predicated region
  $region26: #{policy_forward.1} parent=0 // pred_check
    _
  $region27: #{policy_forward.1} parent=0 // pred_check_branch
    %27 = sbr.rel (0) target = $region29
  $region28: #{policy_forward.1} parent=0 // pred_region
    _
  $region29: #{policy_forward.1} parent=0 // pred_fallthru
    _
  // Predicated region
  $region30: #{policy_forward.1} parent=0 // pred_check
    _
  $region31: #{policy_forward.1} parent=0 // pred_check_branch
    %29 = sbr.rel (0) target = $region33
  $region32: #{policy_forward.1} parent=0 // pred_region
    _
  $region33: #{policy_forward.1} parent=0 // pred_fallthru
    _
  // Predicated region
  $region34: #{policy_forward.1} parent=0 // pred_check
    _
  $region35: #{policy_forward.1} parent=0 // pred_check_branch
    %31 = sbr.rel (0) target = $region37
  $region36: #{policy_forward.1} parent=0 // pred_region
    _
  $region37: #{policy_forward.1} parent=0 // pred_fallthru
    _
  %v32 = vld [vmem:[%s0] sm:$0xff]
  %v33 = vld [vmem:[%s0 + $0x8] sm:$0xff]
  %v34 = vld [vmem:[%s0 + $0x10] sm:$0xff]
  %v35 = vld [vmem:[%s0 + $0x18] sm:$0xff]
  %v36 = vld [vmem:[%s0 + $0x20] sm:$0xff]
  %v37 = vld [vmem:[%s0 + $0x28] sm:$0xff]
  %v38 = vld [vmem:[%s0 + $0x30] sm:$0xff]
  %v39 = vld [vmem:[%s0 + $0x38] sm:$0xff]
  %v40 = vld [vmem:[%s0 + $0x40] sm:$0xff]
  %v41 = vld [vmem:[%s0 + $0x48] sm:$0xff]
  %v42 = vld [vmem:[%s0 + $0x50] sm:$0xff]
  %v43 = vld [vmem:[%s0 + $0x58] sm:$0xff]
  %v44 = vld [vmem:[%s0 + $0x60] sm:$0xff]
  %v45 = vld [vmem:[%s0 + $0x68] sm:$0xff]
  %v46 = vld [vmem:[%s0 + $0x70] sm:$0xff]
  %v47 = vld [vmem:[%s0 + $0x78] sm:$0xff]
  %v48 = vld [vmem:[%s0 + $0x80] sm:$0xff]
  %v49 = vld [vmem:[%s0 + $0x88] sm:$0xff]
  %v50 = vld [vmem:[%s0 + $0x90] sm:$0xff]
  %v51 = vld [vmem:[%s0 + $0x98] sm:$0xff]
  %v52 = vld [vmem:[%s0 + $0xa0] sm:$0xff]
  %v53 = vld [vmem:[%s0 + $0xa8] sm:$0xff]
  %v54 = vld [vmem:[%s0 + $0xb0] sm:$0xff]
  %v55 = vld [vmem:[%s0 + $0xb8] sm:$0xff]
  %v56 = vld [vmem:[%s0 + $0xc0] sm:$0xff]
  %v57 = vld [vmem:[%s0 + $0xc8] sm:$0xff]
  %v58 = vld [vmem:[%s0 + $0xd0] sm:$0xff]
  %v59 = vld [vmem:[%s0 + $0xd8] sm:$0xff]
  %v60 = vld [vmem:[%s0 + $0xe0] sm:$0xff]
  %v61 = vld [vmem:[%s0 + $0xe8] sm:$0xff]
  %v62 = vld [vmem:[%s0 + $0xf0] sm:$0xff]
  %v63 = vld [vmem:[%s0 + $0xf8] sm:$0xff]
  %v64 = vld [vmem:[%s1] sm:$0xff]
  %v65 = vld [vmem:[%s1 + $0x8] sm:$0xff]
  %vm66 = vcmask 130048
  %v68 = vsel %vm66, %v32, 0
  %v71 = vsel %vm66, %v33, 0
  %v74 = vsel %vm66, %v34, 0
  %v77 = vsel %vm66, %v35, 0
  %v80 = vsel %vm66, %v36, 0
  %v83 = vsel %vm66, %v37, 0
  %v86 = vsel %vm66, %v38, 0
  %v89 = vsel %vm66, %v39, 0
  %v92 = vsel %vm66, %v40, 0
  %v95 = vsel %vm66, %v41, 0
  %v98 = vsel %vm66, %v42, 0
  %v101 = vsel %vm66, %v43, 0
  %v104 = vsel %vm66, %v44, 0
  %v107 = vsel %vm66, %v45, 0
  %v110 = vsel %vm66, %v46, 0
  %v113 = vsel %vm66, %v47, 0
  %v116 = vsel %vm66, %v48, 0
  %v119 = vsel %vm66, %v49, 0
  %v122 = vsel %vm66, %v50, 0
  %v125 = vsel %vm66, %v51, 0
  %v128 = vsel %vm66, %v52, 0
  %v131 = vsel %vm66, %v53, 0
  %v134 = vsel %vm66, %v54, 0
  %v137 = vsel %vm66, %v55, 0
  %v140 = vsel %vm66, %v56, 0
  %v143 = vsel %vm66, %v57, 0
  %v146 = vsel %vm66, %v58, 0
  %v149 = vsel %vm66, %v59, 0
  %v152 = vsel %vm66, %v60, 0
  %v155 = vsel %vm66, %v61, 0
  %v158 = vsel %vm66, %v62, 0
  %v161 = vsel %vm66, %v63, 0
  %163 = vmatpush.msra.mxu0 0.0
  %164 = vmatpush.msra.mxu0 0.0
  %165 = vmatpush.msra.mxu0 0.0
  %166 = vmatpush.msra.mxu0 0.0
  %167 = vmatpush.msra.mxu0 0.0
  %168 = vmatpush.msra.mxu0 0.0
  %169 = vmatpush.msra.mxu0 0.0
  %170 = vmatpush.msra.mxu0 0.0
  %171 = vmatpush.msra.mxu0 0.0
  %172 = vmatpush.msra.mxu0 0.0
  %173 = vmatpush.msra.mxu0 0.0
  %174 = vmatpush.msra.mxu0 0.0
  %175 = vmatpush.msra.mxu0 0.0
  %176 = vmatpush.msra.mxu0 0.0
  %177 = vmatpush.msra.mxu0 %v65
  %178 = vmatpush.msra.mxu0 %v64
  %179 = vmatmul.f32.gmra.mxu0 %v68
  %v180 = vpop.f32.mrf.mxu0
  %v181 = vadd.f32 0.0, %v180
  %182 = vmatmul.f32.gmra.mxu0 %v71
  %v183 = vpop.f32.mrf.mxu0
  %v184 = vadd.f32 0.0, %v183
  %185 = vmatmul.f32.gmra.mxu0 %v74
  %v186 = vpop.f32.mrf.mxu0
  %v187 = vadd.f32 0.0, %v186
  %188 = vmatmul.f32.gmra.mxu0 %v77
  %v189 = vpop.f32.mrf.mxu0
  %v190 = vadd.f32 0.0, %v189
  %191 = vmatmul.f32.gmra.mxu0 %v80
  %v192 = vpop.f32.mrf.mxu0
  %v193 = vadd.f32 0.0, %v192
  %194 = vmatmul.f32.gmra.mxu0 %v83
  %v195 = vpop.f32.mrf.mxu0
  %v196 = vadd.f32 0.0, %v195
  %197 = vmatmul.f32.gmra.mxu0 %v86
  %v198 = vpop.f32.mrf.mxu0
  %v199 = vadd.f32 0.0, %v198
  %200 = vmatmul.f32.gmra.mxu0 %v89
  %v201 = vpop.f32.mrf.mxu0
  %v202 = vadd.f32 0.0, %v201
  %203 = vmatmul.f32.gmra.mxu0 %v92
  %v204 = vpop.f32.mrf.mxu0
  %v205 = vadd.f32 0.0, %v204
  %206 = vmatmul.f32.gmra.mxu0 %v95
  %v207 = vpop.f32.mrf.mxu0
  %v208 = vadd.f32 0.0, %v207
  %209 = vmatmul.f32.gmra.mxu0 %v98
  %v210 = vpop.f32.mrf.mxu0
  %v211 = vadd.f32 0.0, %v210
  %212 = vmatmul.f32.gmra.mxu0 %v101
  %v213 = vpop.f32.mrf.mxu0
  %v214 = vadd.f32 0.0, %v213
  %215 = vmatmul.f32.gmra.mxu0 %v104
  %v216 = vpop.f32.mrf.mxu0
  %v217 = vadd.f32 0.0, %v216
  %218 = vmatmul.f32.gmra.mxu0 %v107
  %v219 = vpop.f32.mrf.mxu0
  %v220 = vadd.f32 0.0, %v219
  %221 = vmatmul.f32.gmra.mxu0 %v110
  %v222 = vpop.f32.mrf.mxu0
  %v223 = vadd.f32 0.0, %v222
  %224 = vmatmul.f32.gmra.mxu0 %v113
  %v225 = vpop.f32.mrf.mxu0
  %v226 = vadd.f32 0.0, %v225
  %227 = vmatmul.f32.gmra.mxu0 %v116
  %v228 = vpop.f32.mrf.mxu0
  %v229 = vadd.f32 0.0, %v228
  %230 = vmatmul.f32.gmra.mxu0 %v119
  %v231 = vpop.f32.mrf.mxu0
  %v232 = vadd.f32 0.0, %v231
  %233 = vmatmul.f32.gmra.mxu0 %v122
  %v234 = vpop.f32.mrf.mxu0
  %v235 = vadd.f32 0.0, %v234
  %236 = vmatmul.f32.gmra.mxu0 %v125
  %v237 = vpop.f32.mrf.mxu0
  %v238 = vadd.f32 0.0, %v237
  %239 = vmatmul.f32.gmra.mxu0 %v128
  %v240 = vpop.f32.mrf.mxu0
  %v241 = vadd.f32 0.0, %v240
  %242 = vmatmul.f32.gmra.mxu0 %v131
  %v243 = vpop.f32.mrf.mxu0
  %v244 = vadd.f32 0.0, %v243
  %245 = vmatmul.f32.gmra.mxu0 %v134
  %v246 = vpop.f32.mrf.mxu0
  %v247 = vadd.f32 0.0, %v246
  %248 = vmatmul.f32.gmra.mxu0 %v137
  %v249 = vpop.f32.mrf.mxu0
  %v250 = vadd.f32 0.0, %v249
  %251 = vmatmul.f32.gmra.mxu0 %v140
  %v252 = vpop.f32.mrf.mxu0
  %v253 = vadd.f32 0.0, %v252
  %254 = vmatmul.f32.gmra.mxu0 %v143
  %v255 = vpop.f32.mrf.mxu0
  %v256 = vadd.f32 0.0, %v255
  %257 = vmatmul.f32.gmra.mxu0 %v146
  %v258 = vpop.f32.mrf.mxu0
  %v259 = vadd.f32 0.0, %v258
  %260 = vmatmul.f32.gmra.mxu0 %v149
  %v261 = vpop.f32.mrf.mxu0
  %v262 = vadd.f32 0.0, %v261
  %263 = vmatmul.f32.gmra.mxu0 %v152
  %v264 = vpop.f32.mrf.mxu0
  %v265 = vadd.f32 0.0, %v264
  %266 = vmatmul.f32.gmra.mxu0 %v155
  %v267 = vpop.f32.mrf.mxu0
  %v268 = vadd.f32 0.0, %v267
  %269 = vmatmul.f32.gmra.mxu0 %v158
  %v270 = vpop.f32.mrf.mxu0
  %v271 = vadd.f32 0.0, %v270
  %272 = vmatmul.f32.gmra.mxu0 %v161
  %v273 = vpop.f32.mrf.mxu0
  %v274 = vadd.f32 0.0, %v273
  %275 = vdwg.mxu0
  %vm276 = vcmask 261120
  %v277 = vsel %vm276, %v181, 0.0
  %v278 = vsel %vm276, %v184, 0.0
  %v279 = vadd.f32 %v277, %v278
  %v280 = vsel %vm276, %v187, 0.0
  %v281 = vadd.f32 %v279, %v280
  %v282 = vsel %vm276, %v190, 0.0
  %v283 = vadd.f32 %v281, %v282
  %v284 = vsel %vm276, %v193, 0.0
  %v285 = vadd.f32 %v283, %v284
  %v286 = vsel %vm276, %v196, 0.0
  %v287 = vadd.f32 %v285, %v286
  %v288 = vsel %vm276, %v199, 0.0
  %v289 = vadd.f32 %v287, %v288
  %v290 = vsel %vm276, %v202, 0.0
  %v291 = vadd.f32 %v289, %v290
  %v292 = vsel %vm276, %v205, 0.0
  %v293 = vadd.f32 %v291, %v292
  %v294 = vsel %vm276, %v208, 0.0
  %v295 = vadd.f32 %v293, %v294
  %v296 = vsel %vm276, %v211, 0.0
  %v297 = vadd.f32 %v295, %v296
  %v298 = vsel %vm276, %v214, 0.0
  %v299 = vadd.f32 %v297, %v298
  %v300 = vsel %vm276, %v217, 0.0
  %v301 = vadd.f32 %v299, %v300
  %v302 = vsel %vm276, %v220, 0.0
  %v303 = vadd.f32 %v301, %v302
  %v304 = vsel %vm276, %v223, 0.0
  %v305 = vadd.f32 %v303, %v304
  %v306 = vsel %vm276, %v226, 0.0
  %v307 = vadd.f32 %v305, %v306
  %v308 = vsel %vm276, %v229, 0.0
  %v309 = vadd.f32 %v307, %v308
  %v310 = vsel %vm276, %v232, 0.0
  %v311 = vadd.f32 %v309, %v310
  %v312 = vsel %vm276, %v235, 0.0
  %v313 = vadd.f32 %v311, %v312
  %v314 = vsel %vm276, %v238, 0.0
  %v315 = vadd.f32 %v313, %v314
  %v316 = vsel %vm276, %v241, 0.0
  %v317 = vadd.f32 %v315, %v316
  %v318 = vsel %vm276, %v244, 0.0
  %v319 = vadd.f32 %v317, %v318
  %v320 = vsel %vm276, %v247, 0.0
  %v321 = vadd.f32 %v319, %v320
  %v322 = vsel %vm276, %v250, 0.0
  %v323 = vadd.f32 %v321, %v322
  %v324 = vsel %vm276, %v253, 0.0
  %v325 = vadd.f32 %v323, %v324
  %v326 = vsel %vm276, %v256, 0.0
  %v327 = vadd.f32 %v325, %v326
  %v328 = vsel %vm276, %v259, 0.0
  %v329 = vadd.f32 %v327, %v328
  %v330 = vsel %vm276, %v262, 0.0
  %v331 = vadd.f32 %v329, %v330
  %v332 = vsel %vm276, %v265, 0.0
  %v333 = vadd.f32 %v331, %v332
  %v334 = vsel %vm276, %v268, 0.0
  %v335 = vadd.f32 %v333, %v334
  %v336 = vsel %vm276, %v271, 0.0
  %v337 = vadd.f32 %v335, %v336
  %v338 = vsel %vm276, %v274, 0.0
  %v339 = vadd.f32 %v337, %v338
  %v340 = vrot.slane %v339, 4
  %v341 = vadd.f32 %v339, %v340
  %v342 = vrot.slane %v341, 2
  %v343 = vadd.f32 %v341, %v342
  %v344 = vrot.slane %v343, 1
  %v345 = vadd.f32 %v343, %v344
  %v346 = vrcp.pop 256.0
  %v347 = vmul.f32 256.0, %v346
  %v348 = vsub.f32 1.0, %v347
  %v349 = vmul.f32 %v346, %v348
  %v350 = vadd.f32 %v346, %v349
  %vm351 = vweird.f32 %v346
  %v352 = vsel %vm351, %v346, %v350
  %v353 = vmul.f32 %v345, %v352
  %v354 = vsub.f32 %v181, %v353
  %v355 = vsub.f32 %v184, %v353
  %v356 = vsub.f32 %v187, %v353
  %v357 = vsub.f32 %v190, %v353
  %v358 = vsub.f32 %v193, %v353
  %v359 = vsub.f32 %v196, %v353
  %v360 = vsub.f32 %v199, %v353
  %v361 = vsub.f32 %v202, %v353
  %v362 = vsub.f32 %v205, %v353
  %v363 = vsub.f32 %v208, %v353
  %v364 = vsub.f32 %v211, %v353
  %v365 = vsub.f32 %v214, %v353
  %v366 = vsub.f32 %v217, %v353
  %v367 = vsub.f32 %v220, %v353
  %v368 = vsub.f32 %v223, %v353
  %v369 = vsub.f32 %v226, %v353
  %v370 = vsub.f32 %v229, %v353
  %v371 = vsub.f32 %v232, %v353
  %v372 = vsub.f32 %v235, %v353
  %v373 = vsub.f32 %v238, %v353
  %v374 = vsub.f32 %v241, %v353
  %v375 = vsub.f32 %v244, %v353
  %v376 = vsub.f32 %v247, %v353
  %v377 = vsub.f32 %v250, %v353
  %v378 = vsub.f32 %v253, %v353
  %v379 = vsub.f32 %v256, %v353
  %v380 = vsub.f32 %v259, %v353
  %v381 = vsub.f32 %v262, %v353
  %v382 = vsub.f32 %v265, %v353
  %v383 = vsub.f32 %v268, %v353
  %v384 = vsub.f32 %v271, %v353
  %v385 = vsub.f32 %v274, %v353
  %v386 = vmul.f32 %v354, %v354
  %v387 = vmul.f32 %v355, %v355
  %v388 = vmul.f32 %v356, %v356
  %v389 = vmul.f32 %v357, %v357
  %v390 = vmul.f32 %v358, %v358
  %v391 = vmul.f32 %v359, %v359
  %v392 = vmul.f32 %v360, %v360
  %v393 = vmul.f32 %v361, %v361
  %v394 = vmul.f32 %v362, %v362
  %v395 = vmul.f32 %v363, %v363
  %v396 = vmul.f32 %v364, %v364
  %v397 = vmul.f32 %v365, %v365
  %v398 = vmul.f32 %v366, %v366
  %v399 = vmul.f32 %v367, %v367
  %v400 = vmul.f32 %v368, %v368
  %v401 = vmul.f32 %v369, %v369
  %v402 = vmul.f32 %v370, %v370
  %v403 = vmul.f32 %v371, %v371
  %v404 = vmul.f32 %v372, %v372
  %v405 = vmul.f32 %v373, %v373
  %v406 = vmul.f32 %v374, %v374
  %v407 = vmul.f32 %v375, %v375
  %v408 = vmul.f32 %v376, %v376
  %v409 = vmul.f32 %v377, %v377
  %v410 = vmul.f32 %v378, %v378
  %v411 = vmul.f32 %v379, %v379
  %v412 = vmul.f32 %v380, %v380
  %v413 = vmul.f32 %v381, %v381
  %v414 = vmul.f32 %v382, %v382
  %v415 = vmul.f32 %v383, %v383
  %v416 = vmul.f32 %v384, %v384
  %v417 = vmul.f32 %v385, %v385
  %v418 = vsel %vm276, %v386, 0.0
  %v419 = vsel %vm276, %v387, 0.0
  %v420 = vadd.f32 %v418, %v419
  %v421 = vsel %vm276, %v388, 0.0
  %v422 = vadd.f32 %v420, %v421
  %v423 = vsel %vm276, %v389, 0.0
  %v424 = vadd.f32 %v422, %v423
  %v425 = vsel %vm276, %v390, 0.0
  %v426 = vadd.f32 %v424, %v425
  %v427 = vsel %vm276, %v391, 0.0
  %v428 = vadd.f32 %v426, %v427
  %v429 = vsel %vm276, %v392, 0.0
  %v430 = vadd.f32 %v428, %v429
  %v431 = vsel %vm276, %v393, 0.0
  %v432 = vadd.f32 %v430, %v431
  %v433 = vsel %vm276, %v394, 0.0
  %v434 = vadd.f32 %v432, %v433
  %v435 = vsel %vm276, %v395, 0.0
  %v436 = vadd.f32 %v434, %v435
  %v437 = vsel %vm276, %v396, 0.0
  %v438 = vadd.f32 %v436, %v437
  %v439 = vsel %vm276, %v397, 0.0
  %v440 = vadd.f32 %v438, %v439
  %v441 = vsel %vm276, %v398, 0.0
  %v442 = vadd.f32 %v440, %v441
  %v443 = vsel %vm276, %v399, 0.0
  %v444 = vadd.f32 %v442, %v443
  %v445 = vsel %vm276, %v400, 0.0
  %v446 = vadd.f32 %v444, %v445
  %v447 = vsel %vm276, %v401, 0.0
  %v448 = vadd.f32 %v446, %v447
  %v449 = vsel %vm276, %v402, 0.0
  %v450 = vadd.f32 %v448, %v449
  %v451 = vsel %vm276, %v403, 0.0
  %v452 = vadd.f32 %v450, %v451
  %v453 = vsel %vm276, %v404, 0.0
  %v454 = vadd.f32 %v452, %v453
  %v455 = vsel %vm276, %v405, 0.0
  %v456 = vadd.f32 %v454, %v455
  %v457 = vsel %vm276, %v406, 0.0
  %v458 = vadd.f32 %v456, %v457
  %v459 = vsel %vm276, %v407, 0.0
  %v460 = vadd.f32 %v458, %v459
  %v461 = vsel %vm276, %v408, 0.0
  %v462 = vadd.f32 %v460, %v461
  %v463 = vsel %vm276, %v409, 0.0
  %v464 = vadd.f32 %v462, %v463
  %v465 = vsel %vm276, %v410, 0.0
  %v466 = vadd.f32 %v464, %v465
  %v467 = vsel %vm276, %v411, 0.0
  %v468 = vadd.f32 %v466, %v467
  %v469 = vsel %vm276, %v412, 0.0
  %v470 = vadd.f32 %v468, %v469
  %v471 = vsel %vm276, %v413, 0.0
  %v472 = vadd.f32 %v470, %v471
  %v473 = vsel %vm276, %v414, 0.0
  %v474 = vadd.f32 %v472, %v473
  %v475 = vsel %vm276, %v415, 0.0
  %v476 = vadd.f32 %v474, %v475
  %v477 = vsel %vm276, %v416, 0.0
  %v478 = vadd.f32 %v476, %v477
  %v479 = vsel %vm276, %v417, 0.0
  %v480 = vadd.f32 %v478, %v479
  %v481 = vrot.slane %v480, 4
  %v482 = vadd.f32 %v480, %v481
  %v483 = vrot.slane %v482, 2
  %v484 = vadd.f32 %v482, %v483
  %v485 = vrot.slane %v484, 1
  %v486 = vadd.f32 %v484, %v485
  %v487 = vmul.f32 %v486, %v352
  %v488 = vld [vmem:[%s2] sm:$0x1]
  %v489 = vadd.f32 %v487, 1e-05
  %v490 = vrsqrt.pop %v489
  %v491 = vmul.f32 %v490, %v489
  %v492 = vmul.f32 %v491, %v490
  %v493 = vmul.f32 0.5, %v492
  %v494 = vsub.f32 1.5, %v493
  %v495 = vmul.f32 %v490, %v494
  %vm496 = vweird.f32 %v489
  %vm497 = vweird.f32 %v490
  %vm498 = vmor %vm496, %vm497
  %v499 = vsel %vm498, %v490, %v495
  %v500 = vmul.f32 %v488, %v499
  %v502 = vperm.slane %v500, 0
  %v504 = vmul.f32 %v354, %v502
  %v505 = vmul.f32 %v355, %v502
  %v506 = vmul.f32 %v356, %v502
  %v507 = vmul.f32 %v357, %v502
  %v508 = vmul.f32 %v358, %v502
  %v509 = vmul.f32 %v359, %v502
  %v510 = vmul.f32 %v360, %v502
  %v511 = vmul.f32 %v361, %v502
  %v512 = vmul.f32 %v362, %v502
  %v513 = vmul.f32 %v363, %v502
  %v514 = vmul.f32 %v364, %v502
  %v515 = vmul.f32 %v365, %v502
  %v516 = vmul.f32 %v366, %v502
  %v517 = vmul.f32 %v367, %v502
  %v518 = vmul.f32 %v368, %v502
  %v519 = vmul.f32 %v369, %v502
  %v520 = vmul.f32 %v370, %v502
  %v521 = vmul.f32 %v371, %v502
  %v522 = vmul.f32 %v372, %v502
  %v523 = vmul.f32 %v373, %v502
  %v524 = vmul.f32 %v374, %v502
  %v525 = vmul.f32 %v375, %v502
  %v526 = vmul.f32 %v376, %v502
  %v527 = vmul.f32 %v377, %v502
  %v528 = vmul.f32 %v378, %v502
  %v529 = vmul.f32 %v379, %v502
  %v530 = vmul.f32 %v380, %v502
  %v531 = vmul.f32 %v381, %v502
  %v532 = vmul.f32 %v382, %v502
  %v533 = vmul.f32 %v383, %v502
  %v534 = vmul.f32 %v384, %v502
  %v535 = vmul.f32 %v385, %v502
  %v536 = vld [vmem:[%s3] sm:$0x1]
  %v538 = vperm.slane %v536, 0
  %v540 = vadd.f32 %v504, %v538
  %v541 = vadd.f32 %v505, %v538
  %v542 = vadd.f32 %v506, %v538
  %v543 = vadd.f32 %v507, %v538
  %v544 = vadd.f32 %v508, %v538
  %v545 = vadd.f32 %v509, %v538
  %v546 = vadd.f32 %v510, %v538
  %v547 = vadd.f32 %v511, %v538
  %v548 = vadd.f32 %v512, %v538
  %v549 = vadd.f32 %v513, %v538
  %v550 = vadd.f32 %v514, %v538
  %v551 = vadd.f32 %v515, %v538
  %v552 = vadd.f32 %v516, %v538
  %v553 = vadd.f32 %v517, %v538
  %v554 = vadd.f32 %v518, %v538
  %v555 = vadd.f32 %v519, %v538
  %v556 = vadd.f32 %v520, %v538
  %v557 = vadd.f32 %v521, %v538
  %v558 = vadd.f32 %v522, %v538
  %v559 = vadd.f32 %v523, %v538
  %v560 = vadd.f32 %v524, %v538
  %v561 = vadd.f32 %v525, %v538
  %v562 = vadd.f32 %v526, %v538
  %v563 = vadd.f32 %v527, %v538
  %v564 = vadd.f32 %v528, %v538
  %v565 = vadd.f32 %v529, %v538
  %v566 = vadd.f32 %v530, %v538
  %v567 = vadd.f32 %v531, %v538
  %v568 = vadd.f32 %v532, %v538
  %v569 = vadd.f32 %v533, %v538
  %v570 = vadd.f32 %v534, %v538
  %v571 = vadd.f32 %v535, %v538
  %v572 = vmax.f32 %v540, 0.0
  %v573 = vmax.f32 %v541, 0.0
  %v574 = vmax.f32 %v542, 0.0
  %v575 = vmax.f32 %v543, 0.0
  %v576 = vmax.f32 %v544, 0.0
  %v577 = vmax.f32 %v545, 0.0
  %v578 = vmax.f32 %v546, 0.0
  %v579 = vmax.f32 %v547, 0.0
  %v580 = vmax.f32 %v548, 0.0
  %v581 = vmax.f32 %v549, 0.0
  %v582 = vmax.f32 %v550, 0.0
  %v583 = vmax.f32 %v551, 0.0
  %v584 = vmax.f32 %v552, 0.0
  %v585 = vmax.f32 %v553, 0.0
  %v586 = vmax.f32 %v554, 0.0
  %v587 = vmax.f32 %v555, 0.0
  %v588 = vmax.f32 %v556, 0.0
  %v589 = vmax.f32 %v557, 0.0
  %v590 = vmax.f32 %v558, 0.0
  %v591 = vmax.f32 %v559, 0.0
  %v592 = vmax.f32 %v560, 0.0
  %v593 = vmax.f32 %v561, 0.0
  %v594 = vmax.f32 %v562, 0.0
  %v595 = vmax.f32 %v563, 0.0
  %v596 = vmax.f32 %v564, 0.0
  %v597 = vmax.f32 %v565, 0.0
  %v598 = vmax.f32 %v566, 0.0
  %v599 = vmax.f32 %v567, 0.0
  %v600 = vmax.f32 %v568, 0.0
  %v601 = vmax.f32 %v569, 0.0
  %v602 = vmax.f32 %v570, 0.0
  %v603 = vmax.f32 %v571, 0.0
  %v604 = vld [vmem:[%s4] sm:$0xff]
  %v605 = vld [vmem:[%s4 + $0x8] sm:$0xff]
  %v606 = vld [vmem:[%s4 + $0x10] sm:$0xff]
  %v607 = vld [vmem:[%s4 + $0x18] sm:$0xff]
  %v609 = vsel %vm276, %v572, 0
  %v612 = vsel %vm276, %v573, 0
  %v615 = vsel %vm276, %v574, 0
  %v618 = vsel %vm276, %v575, 0
  %v621 = vsel %vm276, %v576, 0
  %v624 = vsel %vm276, %v577, 0
  %v627 = vsel %vm276, %v578, 0
  %v630 = vsel %vm276, %v579, 0
  %v633 = vsel %vm276, %v580, 0
  %v636 = vsel %vm276, %v581, 0
  %v639 = vsel %vm276, %v582, 0
  %v642 = vsel %vm276, %v583, 0
  %v645 = vsel %vm276, %v584, 0
  %v648 = vsel %vm276, %v585, 0
  %v651 = vsel %vm276, %v586, 0
  %v654 = vsel %vm276, %v587, 0
  %v657 = vsel %vm276, %v588, 0
  %v660 = vsel %vm276, %v589, 0
  %v663 = vsel %vm276, %v590, 0
  %v666 = vsel %vm276, %v591, 0
  %v669 = vsel %vm276, %v592, 0
  %v672 = vsel %vm276, %v593, 0
  %v675 = vsel %vm276, %v594, 0
  %v678 = vsel %vm276, %v595, 0
  %v681 = vsel %vm276, %v596, 0
  %v684 = vsel %vm276, %v597, 0
  %v687 = vsel %vm276, %v598, 0
  %v690 = vsel %vm276, %v599, 0
  %v693 = vsel %vm276, %v600, 0
  %v696 = vsel %vm276, %v601, 0
  %v699 = vsel %vm276, %v602, 0
  %v702 = vsel %vm276, %v603, 0
  %704 = vmatpush.msra.mxu0 0.0
  %705 = vmatpush.msra.mxu0 0.0
  %706 = vmatpush.msra.mxu0 0.0
  %707 = vmatpush.msra.mxu0 0.0
  %708 = vmatpush.msra.mxu0 0.0
  %709 = vmatpush.msra.mxu0 0.0
  %710 = vmatpush.msra.mxu0 0.0
  %711 = vmatpush.msra.mxu0 0.0
  %712 = vmatpush.msra.mxu0 0.0
  %713 = vmatpush.msra.mxu0 0.0
  %714 = vmatpush.msra.mxu0 0.0
  %715 = vmatpush.msra.mxu0 0.0
  %716 = vmatpush.msra.mxu0 %v607
  %717 = vmatpush.msra.mxu0 %v606
  %718 = vmatpush.msra.mxu0 %v605
  %719 = vmatpush.msra.mxu0 %v604
  %720 = vmatmul.f32.gmra.mxu0 %v609
  %v721 = vpop.f32.mrf.mxu0
  %v722 = vadd.f32 0.0, %v721
  %723 = vmatmul.f32.gmra.mxu0 %v612
  %v724 = vpop.f32.mrf.mxu0
  %v725 = vadd.f32 0.0, %v724
  %726 = vmatmul.f32.gmra.mxu0 %v615
  %v727 = vpop.f32.mrf.mxu0
  %v728 = vadd.f32 0.0, %v727
  %729 = vmatmul.f32.gmra.mxu0 %v618
  %v730 = vpop.f32.mrf.mxu0
  %v731 = vadd.f32 0.0, %v730
  %732 = vmatmul.f32.gmra.mxu0 %v621
  %v733 = vpop.f32.mrf.mxu0
  %v734 = vadd.f32 0.0, %v733
  %735 = vmatmul.f32.gmra.mxu0 %v624
  %v736 = vpop.f32.mrf.mxu0
  %v737 = vadd.f32 0.0, %v736
  %738 = vmatmul.f32.gmra.mxu0 %v627
  %v739 = vpop.f32.mrf.mxu0
  %v740 = vadd.f32 0.0, %v739
  %741 = vmatmul.f32.gmra.mxu0 %v630
  %v742 = vpop.f32.mrf.mxu0
  %v743 = vadd.f32 0.0, %v742
  %744 = vmatmul.f32.gmra.mxu0 %v633
  %v745 = vpop.f32.mrf.mxu0
  %v746 = vadd.f32 0.0, %v745
  %747 = vmatmul.f32.gmra.mxu0 %v636
  %v748 = vpop.f32.mrf.mxu0
  %v749 = vadd.f32 0.0, %v748
  %750 = vmatmul.f32.gmra.mxu0 %v639
  %v751 = vpop.f32.mrf.mxu0
  %v752 = vadd.f32 0.0, %v751
  %753 = vmatmul.f32.gmra.mxu0 %v642
  %v754 = vpop.f32.mrf.mxu0
  %v755 = vadd.f32 0.0, %v754
  %756 = vmatmul.f32.gmra.mxu0 %v645
  %v757 = vpop.f32.mrf.mxu0
  %v758 = vadd.f32 0.0, %v757
  %759 = vmatmul.f32.gmra.mxu0 %v648
  %v760 = vpop.f32.mrf.mxu0
  %v761 = vadd.f32 0.0, %v760
  %762 = vmatmul.f32.gmra.mxu0 %v651
  %v763 = vpop.f32.mrf.mxu0
  %v764 = vadd.f32 0.0, %v763
  %765 = vmatmul.f32.gmra.mxu0 %v654
  %v766 = vpop.f32.mrf.mxu0
  %v767 = vadd.f32 0.0, %v766
  %768 = vmatmul.f32.gmra.mxu0 %v657
  %v769 = vpop.f32.mrf.mxu0
  %v770 = vadd.f32 0.0, %v769
  %771 = vmatmul.f32.gmra.mxu0 %v660
  %v772 = vpop.f32.mrf.mxu0
  %v773 = vadd.f32 0.0, %v772
  %774 = vmatmul.f32.gmra.mxu0 %v663
  %v775 = vpop.f32.mrf.mxu0
  %v776 = vadd.f32 0.0, %v775
  %777 = vmatmul.f32.gmra.mxu0 %v666
  %v778 = vpop.f32.mrf.mxu0
  %v779 = vadd.f32 0.0, %v778
  %780 = vmatmul.f32.gmra.mxu0 %v669
  %v781 = vpop.f32.mrf.mxu0
  %v782 = vadd.f32 0.0, %v781
  %783 = vmatmul.f32.gmra.mxu0 %v672
  %v784 = vpop.f32.mrf.mxu0
  %v785 = vadd.f32 0.0, %v784
  %786 = vmatmul.f32.gmra.mxu0 %v675
  %v787 = vpop.f32.mrf.mxu0
  %v788 = vadd.f32 0.0, %v787
  %789 = vmatmul.f32.gmra.mxu0 %v678
  %v790 = vpop.f32.mrf.mxu0
  %v791 = vadd.f32 0.0, %v790
  %792 = vmatmul.f32.gmra.mxu0 %v681
  %v793 = vpop.f32.mrf.mxu0
  %v794 = vadd.f32 0.0, %v793
  %795 = vmatmul.f32.gmra.mxu0 %v684
  %v796 = vpop.f32.mrf.mxu0
  %v797 = vadd.f32 0.0, %v796
  %798 = vmatmul.f32.gmra.mxu0 %v687
  %v799 = vpop.f32.mrf.mxu0
  %v800 = vadd.f32 0.0, %v799
  %801 = vmatmul.f32.gmra.mxu0 %v690
  %v802 = vpop.f32.mrf.mxu0
  %v803 = vadd.f32 0.0, %v802
  %804 = vmatmul.f32.gmra.mxu0 %v693
  %v805 = vpop.f32.mrf.mxu0
  %v806 = vadd.f32 0.0, %v805
  %807 = vmatmul.f32.gmra.mxu0 %v696
  %v808 = vpop.f32.mrf.mxu0
  %v809 = vadd.f32 0.0, %v808
  %810 = vmatmul.f32.gmra.mxu0 %v699
  %v811 = vpop.f32.mrf.mxu0
  %v812 = vadd.f32 0.0, %v811
  %813 = vmatmul.f32.gmra.mxu0 %v702
  %v814 = vpop.f32.mrf.mxu0
  %v815 = vadd.f32 0.0, %v814
  %816 = vdwg.mxu0
  %v817 = vsel %vm276, %v722, 0.0
  %v818 = vsel %vm276, %v725, 0.0
  %v819 = vadd.f32 %v817, %v818
  %v820 = vsel %vm276, %v728, 0.0
  %v821 = vadd.f32 %v819, %v820
  %v822 = vsel %vm276, %v731, 0.0
  %v823 = vadd.f32 %v821, %v822
  %v824 = vsel %vm276, %v734, 0.0
  %v825 = vadd.f32 %v823, %v824
  %v826 = vsel %vm276, %v737, 0.0
  %v827 = vadd.f32 %v825, %v826
  %v828 = vsel %vm276, %v740, 0.0
  %v829 = vadd.f32 %v827, %v828
  %v830 = vsel %vm276, %v743, 0.0
  %v831 = vadd.f32 %v829, %v830
  %v832 = vsel %vm276, %v746, 0.0
  %v833 = vadd.f32 %v831, %v832
  %v834 = vsel %vm276, %v749, 0.0
  %v835 = vadd.f32 %v833, %v834
  %v836 = vsel %vm276, %v752, 0.0
  %v837 = vadd.f32 %v835, %v836
  %v838 = vsel %vm276, %v755, 0.0
  %v839 = vadd.f32 %v837, %v838
  %v840 = vsel %vm276, %v758, 0.0
  %v841 = vadd.f32 %v839, %v840
  %v842 = vsel %vm276, %v761, 0.0
  %v843 = vadd.f32 %v841, %v842
  %v844 = vsel %vm276, %v764, 0.0
  %v845 = vadd.f32 %v843, %v844
  %v846 = vsel %vm276, %v767, 0.0
  %v847 = vadd.f32 %v845, %v846
  %v848 = vsel %vm276, %v770, 0.0
  %v849 = vadd.f32 %v847, %v848
  %v850 = vsel %vm276, %v773, 0.0
  %v851 = vadd.f32 %v849, %v850
  %v852 = vsel %vm276, %v776, 0.0
  %v853 = vadd.f32 %v851, %v852
  %v854 = vsel %vm276, %v779, 0.0
  %v855 = vadd.f32 %v853, %v854
  %v856 = vsel %vm276, %v782, 0.0
  %v857 = vadd.f32 %v855, %v856
  %v858 = vsel %vm276, %v785, 0.0
  %v859 = vadd.f32 %v857, %v858
  %v860 = vsel %vm276, %v788, 0.0
  %v861 = vadd.f32 %v859, %v860
  %v862 = vsel %vm276, %v791, 0.0
  %v863 = vadd.f32 %v861, %v862
  %v864 = vsel %vm276, %v794, 0.0
  %v865 = vadd.f32 %v863, %v864
  %v866 = vsel %vm276, %v797, 0.0
  %v867 = vadd.f32 %v865, %v866
  %v868 = vsel %vm276, %v800, 0.0
  %v869 = vadd.f32 %v867, %v868
  %v870 = vsel %vm276, %v803, 0.0
  %v871 = vadd.f32 %v869, %v870
  %v872 = vsel %vm276, %v806, 0.0
  %v873 = vadd.f32 %v871, %v872
  %v874 = vsel %vm276, %v809, 0.0
  %v875 = vadd.f32 %v873, %v874
  %v876 = vsel %vm276, %v812, 0.0
  %v877 = vadd.f32 %v875, %v876
  %v878 = vsel %vm276, %v815, 0.0
  %v879 = vadd.f32 %v877, %v878
  %v880 = vrot.slane %v879, 4
  %v881 = vadd.f32 %v879, %v880
  %v882 = vrot.slane %v881, 2
  %v883 = vadd.f32 %v881, %v882
  %v884 = vrot.slane %v883, 1
  %v885 = vadd.f32 %v883, %v884
  %v886 = vmul.f32 %v885, %v352
  %v887 = vsub.f32 %v722, %v886
  %v888 = vsub.f32 %v725, %v886
  %v889 = vsub.f32 %v728, %v886
  %v890 = vsub.f32 %v731, %v886
  %v891 = vsub.f32 %v734, %v886
  %v892 = vsub.f32 %v737, %v886
  %v893 = vsub.f32 %v740, %v886
  %v894 = vsub.f32 %v743, %v886
  %v895 = vsub.f32 %v746, %v886
  %v896 = vsub.f32 %v749, %v886
  %v897 = vsub.f32 %v752, %v886
  %v898 = vsub.f32 %v755, %v886
  %v899 = vsub.f32 %v758, %v886
  %v900 = vsub.f32 %v761, %v886
  %v901 = vsub.f32 %v764, %v886
  %v902 = vsub.f32 %v767, %v886
  %v903 = vsub.f32 %v770, %v886
  %v904 = vsub.f32 %v773, %v886
  %v905 = vsub.f32 %v776, %v886
  %v906 = vsub.f32 %v779, %v886
  %v907 = vsub.f32 %v782, %v886
  %v908 = vsub.f32 %v785, %v886
  %v909 = vsub.f32 %v788, %v886
  %v910 = vsub.f32 %v791, %v886
  %v911 = vsub.f32 %v794, %v886
  %v912 = vsub.f32 %v797, %v886
  %v913 = vsub.f32 %v800, %v886
  %v914 = vsub.f32 %v803, %v886
  %v915 = vsub.f32 %v806, %v886
  %v916 = vsub.f32 %v809, %v886
  %v917 = vsub.f32 %v812, %v886
  %v918 = vsub.f32 %v815, %v886
  %v919 = vmul.f32 %v887, %v887
  %v920 = vmul.f32 %v888, %v888
  %v921 = vmul.f32 %v889, %v889
  %v922 = vmul.f32 %v890, %v890
  %v923 = vmul.f32 %v891, %v891
  %v924 = vmul.f32 %v892, %v892
  %v925 = vmul.f32 %v893, %v893
  %v926 = vmul.f32 %v894, %v894
  %v927 = vmul.f32 %v895, %v895
  %v928 = vmul.f32 %v896, %v896
  %v929 = vmul.f32 %v897, %v897
  %v930 = vmul.f32 %v898, %v898
  %v931 = vmul.f32 %v899, %v899
  %v932 = vmul.f32 %v900, %v900
  %v933 = vmul.f32 %v901, %v901
  %v934 = vmul.f32 %v902, %v902
  %v935 = vmul.f32 %v903, %v903
  %v936 = vmul.f32 %v904, %v904
  %v937 = vmul.f32 %v905, %v905
  %v938 = vmul.f32 %v906, %v906
  %v939 = vmul.f32 %v907, %v907
  %v940 = vmul.f32 %v908, %v908
  %v941 = vmul.f32 %v909, %v909
  %v942 = vmul.f32 %v910, %v910
  %v943 = vmul.f32 %v911, %v911
  %v944 = vmul.f32 %v912, %v912
  %v945 = vmul.f32 %v913, %v913
  %v946 = vmul.f32 %v914, %v914
  %v947 = vmul.f32 %v915, %v915
  %v948 = vmul.f32 %v916, %v916
  %v949 = vmul.f32 %v917, %v917
  %v950 = vmul.f32 %v918, %v918
  %v951 = vsel %vm276, %v919, 0.0
  %v952 = vsel %vm276, %v920, 0.0
  %v953 = vadd.f32 %v951, %v952
  %v954 = vsel %vm276, %v921, 0.0
  %v955 = vadd.f32 %v953, %v954
  %v956 = vsel %vm276, %v922, 0.0
  %v957 = vadd.f32 %v955, %v956
  %v958 = vsel %vm276, %v923, 0.0
  %v959 = vadd.f32 %v957, %v958
  %v960 = vsel %vm276, %v924, 0.0
  %v961 = vadd.f32 %v959, %v960
  %v962 = vsel %vm276, %v925, 0.0
  %v963 = vadd.f32 %v961, %v962
  %v964 = vsel %vm276, %v926, 0.0
  %v965 = vadd.f32 %v963, %v964
  %v966 = vsel %vm276, %v927, 0.0
  %v967 = vadd.f32 %v965, %v966
  %v968 = vsel %vm276, %v928, 0.0
  %v969 = vadd.f32 %v967, %v968
  %v970 = vsel %vm276, %v929, 0.0
  %v971 = vadd.f32 %v969, %v970
  %v972 = vsel %vm276, %v930, 0.0
  %v973 = vadd.f32 %v971, %v972
  %v974 = vsel %vm276, %v931, 0.0
  %v975 = vadd.f32 %v973, %v974
  %v976 = vsel %vm276, %v932, 0.0
  %v977 = vadd.f32 %v975, %v976
  %v978 = vsel %vm276, %v933, 0.0
  %v979 = vadd.f32 %v977, %v978
  %v980 = vsel %vm276, %v934, 0.0
  %v981 = vadd.f32 %v979, %v980
  %v982 = vsel %vm276, %v935, 0.0
  %v983 = vadd.f32 %v981, %v982
  %v984 = vsel %vm276, %v936, 0.0
  %v985 = vadd.f32 %v983, %v984
  %v986 = vsel %vm276, %v937, 0.0
  %v987 = vadd.f32 %v985, %v986
  %v988 = vsel %vm276, %v938, 0.0
  %v989 = vadd.f32 %v987, %v988
  %v990 = vsel %vm276, %v939, 0.0
  %v991 = vadd.f32 %v989, %v990
  %v992 = vsel %vm276, %v940, 0.0
  %v993 = vadd.f32 %v991, %v992
  %v994 = vsel %vm276, %v941, 0.0
  %v995 = vadd.f32 %v993, %v994
  %v996 = vsel %vm276, %v942, 0.0
  %v997 = vadd.f32 %v995, %v996
  %v998 = vsel %vm276, %v943, 0.0
  %v999 = vadd.f32 %v997, %v998
  %v1000 = vsel %vm276, %v944, 0.0
  %v1001 = vadd.f32 %v999, %v1000
  %v1002 = vsel %vm276, %v945, 0.0
  %v1003 = vadd.f32 %v1001, %v1002
  %v1004 = vsel %vm276, %v946, 0.0
  %v1005 = vadd.f32 %v1003, %v1004
  %v1006 = vsel %vm276, %v947, 0.0
  %v1007 = vadd.f32 %v1005, %v1006
  %v1008 = vsel %vm276, %v948, 0.0
  %v1009 = vadd.f32 %v1007, %v1008
  %v1010 = vsel %vm276, %v949, 0.0
  %v1011 = vadd.f32 %v1009, %v1010
  %v1012 = vsel %vm276, %v950, 0.0
  %v1013 = vadd.f32 %v1011, %v1012
  %v1014 = vrot.slane %v1013, 4
  %v1015 = vadd.f32 %v1013, %v1014
  %v1016 = vrot.slane %v1015, 2
  %v1017 = vadd.f32 %v1015, %v1016
  %v1018 = vrot.slane %v1017, 1
  %v1019 = vadd.f32 %v1017, %v1018
  %v1020 = vmul.f32 %v1019, %v352
  %v1021 = vld [vmem:[%s5] sm:$0x1]
  %v1022 = vadd.f32 %v1020, 1e-05
  %v1023 = vrsqrt.pop %v1022
  %v1024 = vmul.f32 %v1023, %v1022
  %v1025 = vmul.f32 %v1024, %v1023
  %v1026 = vmul.f32 0.5, %v1025
  %v1027 = vsub.f32 1.5, %v1026
  %v1028 = vmul.f32 %v1023, %v1027
  %vm1029 = vweird.f32 %v1022
  %vm1030 = vweird.f32 %v1023
  %vm1031 = vmor %vm1029, %vm1030
  %v1032 = vsel %vm1031, %v1023, %v1028
  %v1033 = vmul.f32 %v1021, %v1032
  %v1035 = vperm.slane %v1033, 0
  %v1037 = vmul.f32 %v887, %v1035
  %v1038 = vmul.f32 %v888, %v1035
  %v1039 = vmul.f32 %v889, %v1035
  %v1040 = vmul.f32 %v890, %v1035
  %v1041 = vmul.f32 %v891, %v1035
  %v1042 = vmul.f32 %v892, %v1035
  %v1043 = vmul.f32 %v893, %v1035
  %v1044 = vmul.f32 %v894, %v1035
  %v1045 = vmul.f32 %v895, %v1035
  %v1046 = vmul.f32 %v896, %v1035
  %v1047 = vmul.f32 %v897, %v1035
  %v1048 = vmul.f32 %v898, %v1035
  %v1049 = vmul.f32 %v899, %v1035
  %v1050 = vmul.f32 %v900, %v1035
  %v1051 = vmul.f32 %v901, %v1035
  %v1052 = vmul.f32 %v902, %v1035
  %v1053 = vmul.f32 %v903, %v1035
  %v1054 = vmul.f32 %v904, %v1035
  %v1055 = vmul.f32 %v905, %v1035
  %v1056 = vmul.f32 %v906, %v1035
  %v1057 = vmul.f32 %v907, %v1035
  %v1058 = vmul.f32 %v908, %v1035
  %v1059 = vmul.f32 %v909, %v1035
  %v1060 = vmul.f32 %v910, %v1035
  %v1061 = vmul.f32 %v911, %v1035
  %v1062 = vmul.f32 %v912, %v1035
  %v1063 = vmul.f32 %v913, %v1035
  %v1064 = vmul.f32 %v914, %v1035
  %v1065 = vmul.f32 %v915, %v1035
  %v1066 = vmul.f32 %v916, %v1035
  %v1067 = vmul.f32 %v917, %v1035
  %v1068 = vmul.f32 %v918, %v1035
  %v1069 = vld [vmem:[%s6] sm:$0x1]
  %v1071 = vperm.slane %v1069, 0
  %v1073 = vadd.f32 %v1037, %v1071
  %v1074 = vadd.f32 %v1038, %v1071
  %v1075 = vadd.f32 %v1039, %v1071
  %v1076 = vadd.f32 %v1040, %v1071
  %v1077 = vadd.f32 %v1041, %v1071
  %v1078 = vadd.f32 %v1042, %v1071
  %v1079 = vadd.f32 %v1043, %v1071
  %v1080 = vadd.f32 %v1044, %v1071
  %v1081 = vadd.f32 %v1045, %v1071
  %v1082 = vadd.f32 %v1046, %v1071
  %v1083 = vadd.f32 %v1047, %v1071
  %v1084 = vadd.f32 %v1048, %v1071
  %v1085 = vadd.f32 %v1049, %v1071
  %v1086 = vadd.f32 %v1050, %v1071
  %v1087 = vadd.f32 %v1051, %v1071
  %v1088 = vadd.f32 %v1052, %v1071
  %v1089 = vadd.f32 %v1053, %v1071
  %v1090 = vadd.f32 %v1054, %v1071
  %v1091 = vadd.f32 %v1055, %v1071
  %v1092 = vadd.f32 %v1056, %v1071
  %v1093 = vadd.f32 %v1057, %v1071
  %v1094 = vadd.f32 %v1058, %v1071
  %v1095 = vadd.f32 %v1059, %v1071
  %v1096 = vadd.f32 %v1060, %v1071
  %v1097 = vadd.f32 %v1061, %v1071
  %v1098 = vadd.f32 %v1062, %v1071
  %v1099 = vadd.f32 %v1063, %v1071
  %v1100 = vadd.f32 %v1064, %v1071
  %v1101 = vadd.f32 %v1065, %v1071
  %v1102 = vadd.f32 %v1066, %v1071
  %v1103 = vadd.f32 %v1067, %v1071
  %v1104 = vadd.f32 %v1068, %v1071
  %v1105 = vmax.f32 %v1073, 0.0
  %v1106 = vmax.f32 %v1074, 0.0
  %v1107 = vmax.f32 %v1075, 0.0
  %v1108 = vmax.f32 %v1076, 0.0
  %v1109 = vmax.f32 %v1077, 0.0
  %v1110 = vmax.f32 %v1078, 0.0
  %v1111 = vmax.f32 %v1079, 0.0
  %v1112 = vmax.f32 %v1080, 0.0
  %v1113 = vmax.f32 %v1081, 0.0
  %v1114 = vmax.f32 %v1082, 0.0
  %v1115 = vmax.f32 %v1083, 0.0
  %v1116 = vmax.f32 %v1084, 0.0
  %v1117 = vmax.f32 %v1085, 0.0
  %v1118 = vmax.f32 %v1086, 0.0
  %v1119 = vmax.f32 %v1087, 0.0
  %v1120 = vmax.f32 %v1088, 0.0
  %v1121 = vmax.f32 %v1089, 0.0
  %v1122 = vmax.f32 %v1090, 0.0
  %v1123 = vmax.f32 %v1091, 0.0
  %v1124 = vmax.f32 %v1092, 0.0
  %v1125 = vmax.f32 %v1093, 0.0
  %v1126 = vmax.f32 %v1094, 0.0
  %v1127 = vmax.f32 %v1095, 0.0
  %v1128 = vmax.f32 %v1096, 0.0
  %v1129 = vmax.f32 %v1097, 0.0
  %v1130 = vmax.f32 %v1098, 0.0
  %v1131 = vmax.f32 %v1099, 0.0
  %v1132 = vmax.f32 %v1100, 0.0
  %v1133 = vmax.f32 %v1101, 0.0
  %v1134 = vmax.f32 %v1102, 0.0
  %v1135 = vmax.f32 %v1103, 0.0
  %v1136 = vmax.f32 %v1104, 0.0
  %v1137 = vld [vmem:[%s7] sm:$0xff]
  %v1138 = vld [vmem:[%s7 + $0x8] sm:$0xff]
  %v1139 = vld [vmem:[%s7 + $0x10] sm:$0xff]
  %v1140 = vld [vmem:[%s7 + $0x18] sm:$0xff]
  %v1141 = vld [vmem:[%s8] sm:$0x1]
  %v1143 = vperm.slane %v1141, 0
  %v1146 = vsel %vm276, %v1105, 0
  %v1149 = vsel %vm276, %v1106, 0
  %v1152 = vsel %vm276, %v1107, 0
  %v1155 = vsel %vm276, %v1108, 0
  %v1158 = vsel %vm276, %v1109, 0
  %v1161 = vsel %vm276, %v1110, 0
  %v1164 = vsel %vm276, %v1111, 0
  %v1167 = vsel %vm276, %v1112, 0
  %v1170 = vsel %vm276, %v1113, 0
  %v1173 = vsel %vm276, %v1114, 0
  %v1176 = vsel %vm276, %v1115, 0
  %v1179 = vsel %vm276, %v1116, 0
  %v1182 = vsel %vm276, %v1117, 0
  %v1185 = vsel %vm276, %v1118, 0
  %v1188 = vsel %vm276, %v1119, 0
  %v1191 = vsel %vm276, %v1120, 0
  %v1194 = vsel %vm276, %v1121, 0
  %v1197 = vsel %vm276, %v1122, 0
  %v1200 = vsel %vm276, %v1123, 0
  %v1203 = vsel %vm276, %v1124, 0
  %v1206 = vsel %vm276, %v1125, 0
  %v1209 = vsel %vm276, %v1126, 0
  %v1212 = vsel %vm276, %v1127, 0
  %v1215 = vsel %vm276, %v1128, 0
  %v1218 = vsel %vm276, %v1129, 0
  %v1221 = vsel %vm276, %v1130, 0
  %v1224 = vsel %vm276, %v1131, 0
  %v1227 = vsel %vm276, %v1132, 0
  %v1230 = vsel %vm276, %v1133, 0
  %v1233 = vsel %vm276, %v1134, 0
  %v1236 = vsel %vm276, %v1135, 0
  %v1239 = vsel %vm276, %v1136, 0
  %1241 = vmatpush.msra.mxu0 0.0
  %1242 = vmatpush.msra.mxu0 0.0
  %1243 = vmatpush.msra.mxu0 0.0
  %1244 = vmatpush.msra.mxu0 0.0
  %1245 = vmatpush.msra.mxu0 0.0
  %1246 = vmatpush.msra.mxu0 0.0
  %1247 = vmatpush.msra.mxu0 0.0
  %1248 = vmatpush.msra.mxu0 0.0
  %1249 = vmatpush.msra.mxu0 0.0
  %1250 = vmatpush.msra.mxu0 0.0
  %1251 = vmatpush.msra.mxu0 0.0
  %1252 = vmatpush.msra.mxu0 0.0
  %1253 = vmatpush.msra.mxu0 %v1140
  %1254 = vmatpush.msra.mxu0 %v1139
  %1255 = vmatpush.msra.mxu0 %v1138
  %1256 = vmatpush.msra.mxu0 %v1137
  %1257 = vmatmul.f32.gmra.mxu0 %v1146
  %v1258 = vpop.f32.mrf.mxu0
  %v1259 = vadd.f32 %v1143, %v1258
  %1260 = vmatmul.f32.gmra.mxu0 %v1149
  %v1261 = vpop.f32.mrf.mxu0
  %v1262 = vadd.f32 %v1143, %v1261
  %1263 = vmatmul.f32.gmra.mxu0 %v1152
  %v1264 = vpop.f32.mrf.mxu0
  %v1265 = vadd.f32 %v1143, %v1264
  %1266 = vmatmul.f32.gmra.mxu0 %v1155
  %v1267 = vpop.f32.mrf.mxu0
  %v1268 = vadd.f32 %v1143, %v1267
  %1269 = vmatmul.f32.gmra.mxu0 %v1158
  %v1270 = vpop.f32.mrf.mxu0
  %v1271 = vadd.f32 %v1143, %v1270
  %1272 = vmatmul.f32.gmra.mxu0 %v1161
  %v1273 = vpop.f32.mrf.mxu0
  %v1274 = vadd.f32 %v1143, %v1273
  %1275 = vmatmul.f32.gmra.mxu0 %v1164
  %v1276 = vpop.f32.mrf.mxu0
  %v1277 = vadd.f32 %v1143, %v1276
  %1278 = vmatmul.f32.gmra.mxu0 %v1167
  %v1279 = vpop.f32.mrf.mxu0
  %v1280 = vadd.f32 %v1143, %v1279
  %1281 = vmatmul.f32.gmra.mxu0 %v1170
  %v1282 = vpop.f32.mrf.mxu0
  %v1283 = vadd.f32 %v1143, %v1282
  %1284 = vmatmul.f32.gmra.mxu0 %v1173
  %v1285 = vpop.f32.mrf.mxu0
  %v1286 = vadd.f32 %v1143, %v1285
  %1287 = vmatmul.f32.gmra.mxu0 %v1176
  %v1288 = vpop.f32.mrf.mxu0
  %v1289 = vadd.f32 %v1143, %v1288
  %1290 = vmatmul.f32.gmra.mxu0 %v1179
  %v1291 = vpop.f32.mrf.mxu0
  %v1292 = vadd.f32 %v1143, %v1291
  %1293 = vmatmul.f32.gmra.mxu0 %v1182
  %v1294 = vpop.f32.mrf.mxu0
  %v1295 = vadd.f32 %v1143, %v1294
  %1296 = vmatmul.f32.gmra.mxu0 %v1185
  %v1297 = vpop.f32.mrf.mxu0
  %v1298 = vadd.f32 %v1143, %v1297
  %1299 = vmatmul.f32.gmra.mxu0 %v1188
  %v1300 = vpop.f32.mrf.mxu0
  %v1301 = vadd.f32 %v1143, %v1300
  %1302 = vmatmul.f32.gmra.mxu0 %v1191
  %v1303 = vpop.f32.mrf.mxu0
  %v1304 = vadd.f32 %v1143, %v1303
  %1305 = vmatmul.f32.gmra.mxu0 %v1194
  %v1306 = vpop.f32.mrf.mxu0
  %v1307 = vadd.f32 %v1143, %v1306
  %1308 = vmatmul.f32.gmra.mxu0 %v1197
  %v1309 = vpop.f32.mrf.mxu0
  %v1310 = vadd.f32 %v1143, %v1309
  %1311 = vmatmul.f32.gmra.mxu0 %v1200
  %v1312 = vpop.f32.mrf.mxu0
  %v1313 = vadd.f32 %v1143, %v1312
  %1314 = vmatmul.f32.gmra.mxu0 %v1203
  %v1315 = vpop.f32.mrf.mxu0
  %v1316 = vadd.f32 %v1143, %v1315
  %1317 = vmatmul.f32.gmra.mxu0 %v1206
  %v1318 = vpop.f32.mrf.mxu0
  %v1319 = vadd.f32 %v1143, %v1318
  %1320 = vmatmul.f32.gmra.mxu0 %v1209
  %v1321 = vpop.f32.mrf.mxu0
  %v1322 = vadd.f32 %v1143, %v1321
  %1323 = vmatmul.f32.gmra.mxu0 %v1212
  %v1324 = vpop.f32.mrf.mxu0
  %v1325 = vadd.f32 %v1143, %v1324
  %1326 = vmatmul.f32.gmra.mxu0 %v1215
  %v1327 = vpop.f32.mrf.mxu0
  %v1328 = vadd.f32 %v1143, %v1327
  %1329 = vmatmul.f32.gmra.mxu0 %v1218
  %v1330 = vpop.f32.mrf.mxu0
  %v1331 = vadd.f32 %v1143, %v1330
  %1332 = vmatmul.f32.gmra.mxu0 %v1221
  %v1333 = vpop.f32.mrf.mxu0
  %v1334 = vadd.f32 %v1143, %v1333
  %1335 = vmatmul.f32.gmra.mxu0 %v1224
  %v1336 = vpop.f32.mrf.mxu0
  %v1337 = vadd.f32 %v1143, %v1336
  %1338 = vmatmul.f32.gmra.mxu0 %v1227
  %v1339 = vpop.f32.mrf.mxu0
  %v1340 = vadd.f32 %v1143, %v1339
  %1341 = vmatmul.f32.gmra.mxu0 %v1230
  %v1342 = vpop.f32.mrf.mxu0
  %v1343 = vadd.f32 %v1143, %v1342
  %1344 = vmatmul.f32.gmra.mxu0 %v1233
  %v1345 = vpop.f32.mrf.mxu0
  %v1346 = vadd.f32 %v1143, %v1345
  %1347 = vmatmul.f32.gmra.mxu0 %v1236
  %v1348 = vpop.f32.mrf.mxu0
  %v1349 = vadd.f32 %v1143, %v1348
  %1350 = vmatmul.f32.gmra.mxu0 %v1239
  %v1351 = vpop.f32.mrf.mxu0
  %v1352 = vadd.f32 %v1143, %v1351
  %1353 = vdwg.mxu0
  %v1354 = vtanh.pop %v1259
  %v1355 = vtanh.pop %v1262
  %v1356 = vtanh.pop %v1265
  %v1357 = vtanh.pop %v1268
  %v1358 = vtanh.pop %v1271
  %v1359 = vtanh.pop %v1274
  %v1360 = vtanh.pop %v1277
  %v1361 = vtanh.pop %v1280
  %v1362 = vtanh.pop %v1283
  %v1363 = vtanh.pop %v1286
  %v1364 = vtanh.pop %v1289
  %v1365 = vtanh.pop %v1292
  %v1366 = vtanh.pop %v1295
  %v1367 = vtanh.pop %v1298
  %v1368 = vtanh.pop %v1301
  %v1369 = vtanh.pop %v1304
  %v1370 = vtanh.pop %v1307
  %v1371 = vtanh.pop %v1310
  %v1372 = vtanh.pop %v1313
  %v1373 = vtanh.pop %v1316
  %v1374 = vtanh.pop %v1319
  %v1375 = vtanh.pop %v1322
  %v1376 = vtanh.pop %v1325
  %v1377 = vtanh.pop %v1328
  %v1378 = vtanh.pop %v1331
  %v1379 = vtanh.pop %v1334
  %v1380 = vtanh.pop %v1337
  %v1381 = vtanh.pop %v1340
  %v1382 = vtanh.pop %v1343
  %v1383 = vtanh.pop %v1346
  %v1384 = vtanh.pop %v1349
  %v1385 = vtanh.pop %v1352
  %1386 = vst [vmem:[%s9] sm:$0xff] %v1354
  %1387 = vst [vmem:[%s9 + $0x8] sm:$0xff] %v1355
  %1388 = vst [vmem:[%s9 + $0x10] sm:$0xff] %v1356
  %1389 = vst [vmem:[%s9 + $0x18] sm:$0xff] %v1357
  %1390 = vst [vmem:[%s9 + $0x20] sm:$0xff] %v1358
  %1391 = vst [vmem:[%s9 + $0x28] sm:$0xff] %v1359
  %1392 = vst [vmem:[%s9 + $0x30] sm:$0xff] %v1360
  %1393 = vst [vmem:[%s9 + $0x38] sm:$0xff] %v1361
  %1394 = vst [vmem:[%s9 + $0x40] sm:$0xff] %v1362
  %1395 = vst [vmem:[%s9 + $0x48] sm:$0xff] %v1363
  %1396 = vst [vmem:[%s9 + $0x50] sm:$0xff] %v1364
  %1397 = vst [vmem:[%s9 + $0x58] sm:$0xff] %v1365
  %1398 = vst [vmem:[%s9 + $0x60] sm:$0xff] %v1366
  %1399 = vst [vmem:[%s9 + $0x68] sm:$0xff] %v1367
  %1400 = vst [vmem:[%s9 + $0x70] sm:$0xff] %v1368
  %1401 = vst [vmem:[%s9 + $0x78] sm:$0xff] %v1369
  %1402 = vst [vmem:[%s9 + $0x80] sm:$0xff] %v1370
  %1403 = vst [vmem:[%s9 + $0x88] sm:$0xff] %v1371
  %1404 = vst [vmem:[%s9 + $0x90] sm:$0xff] %v1372
  %1405 = vst [vmem:[%s9 + $0x98] sm:$0xff] %v1373
  %1406 = vst [vmem:[%s9 + $0xa0] sm:$0xff] %v1374
  %1407 = vst [vmem:[%s9 + $0xa8] sm:$0xff] %v1375
  %1408 = vst [vmem:[%s9 + $0xb0] sm:$0xff] %v1376
  %1409 = vst [vmem:[%s9 + $0xb8] sm:$0xff] %v1377
  %1410 = vst [vmem:[%s9 + $0xc0] sm:$0xff] %v1378
  %1411 = vst [vmem:[%s9 + $0xc8] sm:$0xff] %v1379
  %1412 = vst [vmem:[%s9 + $0xd0] sm:$0xff] %v1380
  %1413 = vst [vmem:[%s9 + $0xd8] sm:$0xff] %v1381
  %1414 = vst [vmem:[%s9 + $0xe0] sm:$0xff] %v1382
  %1415 = vst [vmem:[%s9 + $0xe8] sm:$0xff] %v1383
  %1416 = vst [vmem:[%s9 + $0xf0] sm:$0xff] %v1384
  %1417 = vst [vmem:[%s9 + $0xf8] sm:$0xff] %v1385
  // Predicated region
  $region38: #{policy_forward.1} parent=0 // pred_check
    _
  $region39: #{policy_forward.1} parent=0 // pred_check_branch
    %1419 = sbr.rel (0) target = $region41
  $region40: #{policy_forward.1} parent=0 // pred_region
    _
  $region41: #{policy_forward.1} parent=0 // pred_fallthru
    _
  // Predicated region
  $region42: #{policy_forward.1} parent=0 // pred_check
    _
  $region43: #{policy_forward.1} parent=0 // pred_check_branch
    %1421 = sbr.rel (0) target = $region45
  $region44: #{policy_forward.1} parent=0 // pred_region
    _
  $region45: #{policy_forward.1} parent=0 // pred_fallthru
    _

</llo_original>
